<compile_context>
chip_gen: v5e
topology: v5e:2x2
jax: 0.10.0
libtpu: 0.0.40
codegen_flags: <defaults>
</compile_context>

<pallas_src>
import jax
import jax.numpy as jnp
from jax import lax
from jax.experimental import pallas as pl
from jax.experimental.pallas import tpu as pltpu

H1 = 20          # MPL_1 output width / lin1 width
H2 = 10          # lin2 / lin3 width
LANE = 128
ONE_LANE = 127   # lane carrying a constant 1.0 through the per-node MLP


def _align8(x):
    return (x + 7) // 8 * 8


def _round_up(x, m):
    return (x + m - 1) // m * m


def _blob_layout(d_node, d_edge):
    """Row offsets of the packed (rows, 128) parameter blob.
    All blocks are 128 lanes wide and start on 8-row boundaries."""
    dm = d_node + d_edge + 1   # w_msg rows: [w_msg_src ; w_msg_edge ; b_msg]
    dn = d_node + 1            # w_node rows: [w_node ; b_node (ONE_LANE<-1)]
    layout, r = {}, 0

    def add(name, rows):
        nonlocal r
        layout[name] = r
        r = _align8(r + rows)

    add("w_msg", dm)
    add("w_node", dn)
    add("w1", LANE)            # rows 0..19 = w1, row ONE_LANE = [b1 | 1@ONE_LANE]
    add("w2", LANE)            # rows 0..19 = w2, row ONE_LANE = [b2 | 1@ONE_LANE]
    add("w3", LANE)            # rows 0..9  = w3 (bias added explicitly post-scatter)
    add("w4", LANE)            # rows 0..9  = w4
    add("b34", 2)              # row 0 = b3, row 1 = b4
    return layout, r


def pack_params(params, d_node, d_edge):
    layout, rows = _blob_layout(d_node, d_edge)
    blob = jnp.zeros((rows, LANE), jnp.float32)

    r0 = layout["w_msg"]
    blob = blob.at[r0:r0 + d_node, :H1].set(params["w_msg_src"])
    blob = blob.at[r0 + d_node:r0 + d_node + d_edge, :H1].set(params["w_msg_edge"])
    blob = blob.at[r0 + d_node + d_edge, :H1].set(params["b_msg"].reshape(-1))

    r0 = layout["w_node"]
    blob = blob.at[r0:r0 + d_node, :H1].set(params["w_node"])
    blob = blob.at[r0 + d_node, :H1].set(params["b_node"].reshape(-1))
    blob = blob.at[r0 + d_node, ONE_LANE].set(1.0)   # establish the ones lane

    r0 = layout["w1"]
    blob = blob.at[r0:r0 + H1, :H1].set(params["w1"])
    blob = blob.at[r0 + ONE_LANE, :H1].set(params["b1"].reshape(-1))
    blob = blob.at[r0 + ONE_LANE, ONE_LANE].set(1.0)

    r0 = layout["w2"]
    blob = blob.at[r0:r0 + H1, :H2].set(params["w2"])
    blob = blob.at[r0 + ONE_LANE, :H2].set(params["b2"].reshape(-1))
    blob = blob.at[r0 + ONE_LANE, ONE_LANE].set(1.0)

    r0 = layout["w3"]
    blob = blob.at[r0:r0 + H2, :H2].set(params["w3"])

    r0 = layout["w4"]
    blob = blob.at[r0:r0 + H2, :1].set(params["w4"])

    r0 = layout["b34"]
    blob = blob.at[r0, :H2].set(params["b3"].reshape(-1))
    blob = blob.at[r0 + 1, :1].set(params["b4"].reshape(-1))
    return blob


def model9_forward(edge_index, node_attr, edge_attr, batch, params, num_graphs,
                   *, edge_block=512):
    """edge_index: (E,2) int32 [src,dst]; node_attr: (N,D) f32;
    edge_attr: (E,De) f32; batch: (N,) int32. Returns (num_graphs, 1) f32."""
    N, D = node_attr.shape
    E, De = edge_attr.shape
    G = int(num_graphs)
    Dn = D + 1                 # node features + ones column
    Dm = D + De + 1            # gathered src feats + edge feats + ones column

    # ---- edge tiling (edge axis is the only one that can grow unbounded) ----
    if E <= edge_block:
        TE = _align8(E)
        E_pad = TE
    else:
        assert edge_block % 128 == 0, "edge_block must be a multiple of 128"
        TE = edge_block
        E_pad = _round_up(E, TE)
    n_blocks = E_pad // TE
    N_pad = _align8(N)
    Gp = max(8, _align8(G))    # sublane-dense output tile

    layout, R = _blob_layout(D, De)
    blob = pack_params(params, D, De)

    src = edge_index[:, 0].astype(jnp.int32)
    dst = edge_index[:, 1].astype(jnp.int32)

    # Graph gather done here with XLA's native gather (no in-kernel (E,N)
    # one-hot).  Ones column folds b_msg / b_node into the matmuls; padded
    # rows are all-zero (incl. the ones column) so they contribute nothing.
    node_src = jnp.take(node_attr, src, axis=0)                        # (E, D)
    edge_in = jnp.concatenate(
        [node_src, edge_attr, jnp.ones((E, 1), jnp.float32)], axis=1)  # (E, Dm)
    edge_in = jnp.pad(edge_in, ((0, E_pad - E), (0, 0)))
    node_in = jnp.concatenate(
        [node_attr, jnp.ones((N, 1), jnp.float32)], axis=1)            # (N, Dn)
    node_in = jnp.pad(node_in, ((0, N_pad - N), (0, 0)))

    # index rows; padded entries point at a non-existent node/graph -> dropped
    dst_row = jnp.pad(dst, (0, E_pad - E),
                      constant_values=N_pad).reshape(1, E_pad)
    batch_row = jnp.pad(jnp.asarray(batch, jnp.int32), (0, N_pad - N),
                        constant_values=Gp).reshape(1, N_pad)

    f32, bf16 = jnp.float32, jnp.bfloat16

    def w(blob_ref, name, rows):
        r0 = layout[name]
        return blob_ref[r0:r0 + rows, :]          # (rows, 128) f32

    def kernel(dst_ref, batch_ref, node_ref, edge_ref, blob_ref, out_ref, agg_ref):
        k = pl.program_id(0)
        nk = pl.num_programs(0)

        @pl.when(k == 0)
        def _init():
            agg_ref[...] = jnp.zeros_like(agg_ref)

        # per-edge messages for this edge block; b_msg folded via ones column
        msg = jnp.dot(edge_ref[...], w(blob_ref, "w_msg", Dm),
                      preferred_element_type=f32)                     # (TE, 128)

        # scatter-add to destination nodes: bf16 one-hot @ bf16 msg, f32 acc
        dst_oh = (dst_ref[...] ==
                  lax.broadcasted_iota(jnp.int32, (N_pad, TE), 0)).astype(bf16)
        agg_ref[...] += jnp.dot(dst_oh, msg.astype(bf16),
                                preferred_element_type=f32)           # (N_pad, 128)

        @pl.when(k == nk - 1)
        def _finalize():
            # MPL_1 node update + ReLU (b_node + ones-lane come from node_in)
            x = jnp.maximum(
                jnp.dot(node_ref[...], w(blob_ref, "w_node", Dn),
                        preferred_element_type=f32) + agg_ref[...], 0.0)
            # lin1 / lin2 + ReLU (biases folded via ONE_LANE)
            x = jnp.maximum(jnp.dot(x, w(blob_ref, "w1", LANE),
                                    preferred_element_type=f32), 0.0)
            x = jnp.maximum(jnp.dot(x, w(blob_ref, "w2", LANE),
                                    preferred_element_type=f32), 0.0)
            # segment_coo(reduce='sum') over graphs: bf16 one-hot scatter
            b_oh = (batch_ref[...] ==
                    lax.broadcasted_iota(jnp.int32, (Gp, N_pad), 0)).astype(bf16)
            g = jnp.dot(b_oh, x.astype(bf16),
                        preferred_element_type=f32)                   # (Gp, 128)
            # lin3 + ReLU, lin4 (explicit biases: ONE_LANE holds per-graph node
            # counts after the scatter, so it cannot carry the bias here)
            rb = layout["b34"]
            g = jnp.maximum(jnp.dot(g, w(blob_ref, "w3", LANE),
                                    preferred_element_type=f32)
                            + blob_ref[rb:rb + 1, :], 0.0)
            out_ref[...] = (jnp.dot(g, w(blob_ref, "w4", LANE),
                                    preferred_element_type=f32)
                            + blob_ref[rb + 1:rb + 2, :])              # (Gp, 128)

    grid_spec = pltpu.PrefetchScalarGridSpec(
        num_scalar_prefetch=0,
        grid=(n_blocks,),
        in_specs=[
            pl.BlockSpec((1, TE), lambda k: (0, k)),       # dst ids   (streamed)
            pl.BlockSpec((1, N_pad), lambda k: (0, 0)),    # batch ids (resident)
            pl.BlockSpec((N_pad, Dn), lambda k: (0, 0)),   # node feats (resident)
            pl.BlockSpec((TE, Dm), lambda k: (k, 0)),      # edge feats (streamed)
            pl.BlockSpec((R, LANE), lambda k: (0, 0)),     # packed params (1 DMA)
        ],
        out_specs=pl.BlockSpec((Gp, LANE), lambda k: (0, 0)),
        scratch_shapes=[pltpu.VMEM((N_pad, LANE), jnp.float32)],   # agg accumulator
    )
    out = pl.pallas_call(
        kernel,
        out_shape=jax.ShapeDtypeStruct((Gp, LANE), jnp.float32),
        grid_spec=grid_spec,
        compiler_params=pltpu.CompilerParams(
            dimension_semantics=("arbitrary",),
            vmem_limit_bytes=32 * 1024 * 1024),
    )(dst_row, batch_row, node_in, edge_in, blob)
    return out[:G, :1]


def init_params(key, d_node, d_edge):
    """PyTorch-style uniform(-1/sqrt(fan_in)) init; weights stored (in, out)."""
    def lin(k, fan_in, fan_out):
        kw, kb = jax.random.split(k)
        bound = 1.0 / jnp.sqrt(fan_in)
        wgt = jax.random.uniform(kw, (fan_in, fan_out), jnp.float32, -bound, bound)
        b = jax.random.uniform(kb, (1, fan_out), jnp.float32, -bound, bound)
        return wgt, b

    ks = jax.random.split(key, 6)
    w_node, b_node = lin(ks[0], d_node, H1)
    w_msg, b_msg = lin(ks[1], d_node + d_edge, H1)
    w1, b1 = lin(ks[2], H1, H1)
    w2, b2 = lin(ks[3], H1, H2)
    w3, b3 = lin(ks[4], H2, H2)
    w4, b4 = lin(ks[5], H2, 1)
    return dict(w_node=w_node, b_node=b_node,
                w_msg_src=w_msg[:d_node], w_msg_edge=w_msg[d_node:], b_msg=b_msg,
                w1=w1, b1=b1, w2=w2, b2=b2, w3=w3, b3=b3, w4=w4, b4=b4)


def model9_reference(edge_index, node_attr, edge_attr, batch, params, num_graphs):
    """Plain-JAX f32 reference for validation."""
    src, dst = edge_index[:, 0], edge_index[:, 1]
    N = node_attr.shape[0]
    msg = (node_attr[src] @ params["w_msg_src"]
           + edge_attr @ params["w_msg_edge"] + params["b_msg"])
    agg = jax.ops.segment_sum(msg, dst, num_segments=N)
    x = jax.nn.relu(node_attr @ params["w_node"] + params["b_node"] + agg)
    x = jax.nn.relu(x @ params["w1"] + params["b1"])
    x = jax.nn.relu(x @ params["w2"] + params["b2"])
    g = jax.ops.segment_sum(x, batch, num_segments=num_graphs)
    g = jax.nn.relu(g @ params["w3"] + params["b3"])
    return g @ params["w4"] + params["b4"]


if __name__ == "__main__":
    key = jax.random.PRNGKey(0)
    k_p, k_na, k_ea, k_e = jax.random.split(key, 4)

    N, E, G = 32, 256, 2          # nodes, edges, graphs
    D_NODE, D_EDGE = 4, 4         # input_dimension = 4, edge feature dim = 4

    params = init_params(k_p, D_NODE, D_EDGE)
    node_attr = jax.random.normal(k_na, (N, D_NODE), jnp.float32)
    edge_attr = jax.random.normal(k_ea, (E, D_EDGE), jnp.float32)

    # nodes 0..15 -> graph 0, nodes 16..31 -> graph 1; edges stay in-graph
    half = N // 2
    batch = jnp.concatenate([jnp.zeros((half,), jnp.int32),
                             jnp.ones((half,), jnp.int32)], axis=0)
    e0 = jax.random.randint(k_e, (E // 2, 2), 0, half, jnp.int32)
    e1 = jax.random.randint(jax.random.fold_in(k_e, 1), (E // 2, 2), 0, half,
                            jnp.int32) + half
    edge_index = jnp.concatenate([e0, e1], axis=0).astype(jnp.int32)

    ref = model9_reference(edge_index, node_attr, edge_attr, batch, params, G)

    # multi-block edge grid (2 blocks of 128 edges) and single-block path
    out_tiled = model9_forward(edge_index, node_attr, edge_attr, batch, params,
                               G, edge_block=128)
    out_tiled = jax.block_until_ready(out_tiled)
    out_single = model9_forward(edge_index, node_attr, edge_attr, batch, params,
                                G, edge_block=512)
    out_single = jax.block_until_ready(out_single)

    assert out_tiled.shape == (G, 1) and out_single.shape == (G, 1)
    # The two scatter matmuls run in bf16 (f32 accumulation), so compare with a
    # bf16-rounding-level tolerance against the pure-f32 reference.
    scale = 1e-6 + jnp.max(jnp.abs(ref))
    err_t = float(jnp.max(jnp.abs(out_tiled - ref)) / scale)
    err_s = float(jnp.max(jnp.abs(out_single - ref)) / scale)
    assert err_t < 3e-2 and err_s < 3e-2, (out_tiled, out_single, ref, err_t, err_s)
    print("KERNEL_OK")
</pallas_src>

<mosaic_0001>
module attributes {stable_mosaic.version = 11 : i64} {
  func.func @kernel(%arg0: i32, %arg1: memref<1x128xi32, #tpu.memory_space<vmem>>, %arg2: memref<1x32xi32, #tpu.memory_space<vmem>>, %arg3: memref<32x5xf32, #tpu.memory_space<vmem>>, %arg4: memref<128x9xf32, #tpu.memory_space<vmem>>, %arg5: memref<544x128xf32, #tpu.memory_space<vmem>>, %arg6: memref<8x128xf32, #tpu.memory_space<vmem>>, %arg7: memref<32x128xf32, #tpu.memory_space<vmem>>) attributes {dimension_semantics = [#tpu.dimension_semantics<arbitrary>], iteration_bounds = array<i64: 2>, scalar_prefetch = 0 : i64, scratch_operands = 1 : i64, tpu.core_type = #tpu.core_type<tc>, window_params = [{transform_indices = @transform_0, window_bounds = array<i64: 1, 128>}, {pipeline_mode = #tpu.pipeline_mode<synchronous>, transform_indices = @transform_1, window_bounds = array<i64: 1, 32>}, {pipeline_mode = #tpu.pipeline_mode<synchronous>, transform_indices = @transform_2, window_bounds = array<i64: 32, 5>}, {transform_indices = @transform_3, window_bounds = array<i64: 128, 9>}, {pipeline_mode = #tpu.pipeline_mode<synchronous>, transform_indices = @transform_4, window_bounds = array<i64: 544, 128>}, {pipeline_mode = #tpu.pipeline_mode<synchronous>, transform_indices = @transform_5, window_bounds = array<i64: 8, 128>}]} {
    %c0_i32 = arith.constant 0 : i32
    %0 = arith.cmpi eq, %arg0, %c0_i32 : i32
    %1 = arith.extui %0 : i1 to i32
    %c0_i32_0 = arith.constant 0 : i32
    %2 = arith.cmpi ne, %1, %c0_i32_0 : i32
    scf.if %2 {
      %cst_12 = arith.constant 0.000000e+00 : f32
      %21 = vector.broadcast %cst_12 : f32 to vector<32x128xf32>
      %c0_13 = arith.constant 0 : index
      %c0_14 = arith.constant 0 : index
      %22 = vector.load %arg7[%c0_13, %c0_14] : memref<32x128xf32, #tpu.memory_space<vmem>>, vector<32x128xf32>
      tpu.vector_store %arg7[%c0_13, %c0_14], %21 {strides = array<i32>} : memref<32x128xf32, #tpu.memory_space<vmem>>, vector<32x128xf32>,
    } else {
    }
    %c0 = arith.constant 0 : index
    %c0_1 = arith.constant 0 : index
    %3 = vector.load %arg4[%c0, %c0_1] : memref<128x9xf32, #tpu.memory_space<vmem>>, vector<128x9xf32>
    %c0_2 = arith.constant 0 : index
    %c0_3 = arith.constant 0 : index
    %4 = vector.load %arg5[%c0_2, %c0_3] : memref<544x128xf32, #tpu.memory_space<vmem>>, vector<9x128xf32>
    %cst = arith.constant dense<0.000000e+00> : vector<128x128xf32>
    %5 = tpu.matmul %3, %4, %cst {dimension_numbers = #tpu.dot_dimension_numbers<[1], [0], [0], [1], [0, 0, 1, 1], [], []>} : vector<128x9xf32>, vector<9x128xf32>, vector<128x128xf32> -> vector<128x128xf32>
    %c0_4 = arith.constant 0 : index
    %c0_5 = arith.constant 0 : index
    %6 = vector.load %arg1[%c0_4, %c0_5] : memref<1x128xi32, #tpu.memory_space<vmem>>, vector<1x128xi32>
    %7 = tpu.iota {dimensions = array<i32: 0>} : vector<32x128xi32>
    %8 = vector.broadcast %6 : vector<1x128xi32> to vector<32x128xi32>
    %9 = arith.cmpi eq, %8, %7 : vector<32x128xi32>
    %10 = arith.extui %9 : vector<32x128xi1> to vector<32x128xi32>
    %11 = arith.sitofp %10 : vector<32x128xi32> to vector<32x128xf32>
    %12 = arith.truncf %11 : vector<32x128xf32> to vector<32x128xbf16>
    %c0_6 = arith.constant 0 : index
    %c0_7 = arith.constant 0 : index
    %13 = vector.load %arg7[%c0_6, %c0_7] : memref<32x128xf32, #tpu.memory_space<vmem>>, vector<32x128xf32>
    %14 = arith.truncf %5 : vector<128x128xf32> to vector<128x128xbf16>
    %cst_8 = arith.constant dense<0.000000e+00> : vector<32x128xf32>
    %15 = tpu.matmul %12, %14, %cst_8 {dimension_numbers = #tpu.dot_dimension_numbers<[1], [0], [0], [1], [0, 0, 1, 1], [], []>} : vector<32x128xbf16>, vector<128x128xbf16>, vector<32x128xf32> -> vector<32x128xf32>
    %16 = arith.addf %13, %15 : vector<32x128xf32>
    %c0_9 = arith.constant 0 : index
    %c0_10 = arith.constant 0 : index
    %17 = vector.load %arg7[%c0_9, %c0_10] : memref<32x128xf32, #tpu.memory_space<vmem>>, vector<32x128xf32>
    tpu.vector_store %arg7[%c0_9, %c0_10], %16 {strides = array<i32>} : memref<32x128xf32, #tpu.memory_space<vmem>>, vector<32x128xf32>,
    %c1_i32 = arith.constant 1 : i32
    %18 = arith.cmpi eq, %arg0, %c1_i32 : i32
    %19 = arith.extui %18 : i1 to i32
    %c0_i32_11 = arith.constant 0 : i32
    %20 = arith.cmpi ne, %19, %c0_i32_11 : i32
    scf.if %20 {
      %c0_12 = arith.constant 0 : index
      %c0_13 = arith.constant 0 : index
      %21 = vector.load %arg3[%c0_12, %c0_13] : memref<32x5xf32, #tpu.memory_space<vmem>>, vector<32x5xf32>
      %c16 = arith.constant 16 : index
      %c0_14 = arith.constant 0 : index
      %22 = vector.load %arg5[%c16, %c0_14] : memref<544x128xf32, #tpu.memory_space<vmem>>, vector<5x128xf32>
      %cst_15 = arith.constant dense<0.000000e+00> : vector<32x128xf32>
      %23 = tpu.matmul %21, %22, %cst_15 {dimension_numbers = #tpu.dot_dimension_numbers<[1], [0], [0], [1], [0, 0, 1, 1], [], []>} : vector<32x5xf32>, vector<5x128xf32>, vector<32x128xf32> -> vector<32x128xf32>
      %c0_16 = arith.constant 0 : index
      %c0_17 = arith.constant 0 : index
      %24 = vector.load %arg7[%c0_16, %c0_17] : memref<32x128xf32, #tpu.memory_space<vmem>>, vector<32x128xf32>
      %25 = arith.addf %23, %24 : vector<32x128xf32>
      %cst_18 = arith.constant 0.000000e+00 : f32
      %26 = vector.broadcast %cst_18 : f32 to vector<32x128xf32>
      %27 = arith.maximumf %25, %26 : vector<32x128xf32>
      %c24 = arith.constant 24 : index
      %c0_19 = arith.constant 0 : index
      %28 = vector.load %arg5[%c24, %c0_19] : memref<544x128xf32, #tpu.memory_space<vmem>>, vector<128x128xf32>
      %cst_20 = arith.constant dense<0.000000e+00> : vector<32x128xf32>
      %29 = tpu.matmul %27, %28, %cst_20 {dimension_numbers = #tpu.dot_dimension_numbers<[1], [0], [0], [1], [0, 0, 1, 1], [], []>} : vector<32x128xf32>, vector<128x128xf32>, vector<32x128xf32> -> vector<32x128xf32>
      %cst_21 = arith.constant 0.000000e+00 : f32
      %30 = vector.broadcast %cst_21 : f32 to vector<32x128xf32>
      %31 = arith.maximumf %29, %30 : vector<32x128xf32>
      %c152 = arith.constant 152 : index
      %c0_22 = arith.constant 0 : index
      %32 = vector.load %arg5[%c152, %c0_22] : memref<544x128xf32, #tpu.memory_space<vmem>>, vector<128x128xf32>
      %cst_23 = arith.constant dense<0.000000e+00> : vector<32x128xf32>
      %33 = tpu.matmul %31, %32, %cst_23 {dimension_numbers = #tpu.dot_dimension_numbers<[1], [0], [0], [1], [0, 0, 1, 1], [], []>} : vector<32x128xf32>, vector<128x128xf32>, vector<32x128xf32> -> vector<32x128xf32>
      %cst_24 = arith.constant 0.000000e+00 : f32
      %34 = vector.broadcast %cst_24 : f32 to vector<32x128xf32>
      %35 = arith.maximumf %33, %34 : vector<32x128xf32>
      %c0_25 = arith.constant 0 : index
      %c0_26 = arith.constant 0 : index
      %36 = vector.load %arg2[%c0_25, %c0_26] : memref<1x32xi32, #tpu.memory_space<vmem>>, vector<1x32xi32>
      %37 = tpu.iota {dimensions = array<i32: 0>} : vector<8x32xi32>
      %38 = vector.broadcast %36 : vector<1x32xi32> to vector<8x32xi32>
      %39 = arith.cmpi eq, %38, %37 : vector<8x32xi32>
      %40 = arith.extui %39 : vector<8x32xi1> to vector<8x32xi32>
      %41 = arith.sitofp %40 : vector<8x32xi32> to vector<8x32xf32>
      %42 = arith.truncf %41 : vector<8x32xf32> to vector<8x32xbf16>
      %43 = arith.truncf %35 : vector<32x128xf32> to vector<32x128xbf16>
      %cst_27 = arith.constant dense<0.000000e+00> : vector<8x128xf32>
      %44 = tpu.matmul %42, %43, %cst_27 {dimension_numbers = #tpu.dot_dimension_numbers<[1], [0], [0], [1], [0, 0, 1, 1], [], []>} : vector<8x32xbf16>, vector<32x128xbf16>, vector<8x128xf32> -> vector<8x128xf32>
      %c280 = arith.constant 280 : index
      %c0_28 = arith.constant 0 : index
      %45 = vector.load %arg5[%c280, %c0_28] : memref<544x128xf32, #tpu.memory_space<vmem>>, vector<128x128xf32>
      %cst_29 = arith.constant dense<0.000000e+00> : vector<8x128xf32>
      %46 = tpu.matmul %44, %45, %cst_29 {dimension_numbers = #tpu.dot_dimension_numbers<[1], [0], [0], [1], [0, 0, 1, 1], [], []>} : vector<8x128xf32>, vector<128x128xf32>, vector<8x128xf32> -> vector<8x128xf32>
      %c536 = arith.constant 536 : index
      %c0_30 = arith.constant 0 : index
      %47 = vector.load %arg5[%c536, %c0_30] : memref<544x128xf32, #tpu.memory_space<vmem>>, vector<1x128xf32>
      %48 = vector.broadcast %47 : vector<1x128xf32> to vector<8x128xf32>
      %49 = arith.addf %46, %48 : vector<8x128xf32>
      %cst_31 = arith.constant 0.000000e+00 : f32
      %50 = vector.broadcast %cst_31 : f32 to vector<8x128xf32>
      %51 = arith.maximumf %49, %50 : vector<8x128xf32>
      %c408 = arith.constant 408 : index
      %c0_32 = arith.constant 0 : index
      %52 = vector.load %arg5[%c408, %c0_32] : memref<544x128xf32, #tpu.memory_space<vmem>>, vector<128x128xf32>
      %cst_33 = arith.constant dense<0.000000e+00> : vector<8x128xf32>
      %53 = tpu.matmul %51, %52, %cst_33 {dimension_numbers = #tpu.dot_dimension_numbers<[1], [0], [0], [1], [0, 0, 1, 1], [], []>} : vector<8x128xf32>, vector<128x128xf32>, vector<8x128xf32> -> vector<8x128xf32>
      %c537 = arith.constant 537 : index
      %c0_34 = arith.constant 0 : index
      %54 = vector.load %arg5[%c537, %c0_34] : memref<544x128xf32, #tpu.memory_space<vmem>>, vector<1x128xf32>
      %55 = vector.broadcast %54 : vector<1x128xf32> to vector<8x128xf32>
      %56 = arith.addf %53, %55 : vector<8x128xf32>
      %c0_35 = arith.constant 0 : index
      %c0_36 = arith.constant 0 : index
      %57 = vector.load %arg6[%c0_35, %c0_36] : memref<8x128xf32, #tpu.memory_space<vmem>>, vector<8x128xf32>
      tpu.vector_store %arg6[%c0_35, %c0_36], %56 {strides = array<i32>} : memref<8x128xf32, #tpu.memory_space<vmem>>, vector<8x128xf32>,
    } else {
    }
    return
  }
  func.func @transform_0(%arg0: i32) -> (i32, i32) {
    %c0_i32 = arith.constant 0 : i32
    %c0_i32_0 = arith.constant 0 : i32
    return %c0_i32, %arg0 : i32, i32
  }
  func.func @transform_1(%arg0: i32) -> (i32, i32) {
    %c0_i32 = arith.constant 0 : i32
    %c0_i32_0 = arith.constant 0 : i32
    %c0_i32_1 = arith.constant 0 : i32
    return %c0_i32, %c0_i32_0 : i32, i32
  }
  func.func @transform_2(%arg0: i32) -> (i32, i32) {
    %c0_i32 = arith.constant 0 : i32
    %c0_i32_0 = arith.constant 0 : i32
    %c0_i32_1 = arith.constant 0 : i32
    return %c0_i32, %c0_i32_0 : i32, i32
  }
  func.func @transform_3(%arg0: i32) -> (i32, i32) {
    %c0_i32 = arith.constant 0 : i32
    %c0_i32_0 = arith.constant 0 : i32
    return %arg0, %c0_i32 : i32, i32
  }
  func.func @transform_4(%arg0: i32) -> (i32, i32) {
    %c0_i32 = arith.constant 0 : i32
    %c0_i32_0 = arith.constant 0 : i32
    %c0_i32_1 = arith.constant 0 : i32
    return %c0_i32, %c0_i32_0 : i32, i32
  }
  func.func @transform_5(%arg0: i32) -> (i32, i32) {
    %c0_i32 = arith.constant 0 : i32
    %c0_i32_0 = arith.constant 0 : i32
    %c0_i32_1 = arith.constant 0 : i32
    return %c0_i32, %c0_i32_0 : i32, i32
  }
}

</mosaic_0001>

<llo_original>
// kernel: tpu_custom_call.1
$region0: #{tpu_custom_call.1}
  #allocation0 [shape = 'u32[]', space=smem, size = 0x4, offset = 0x4, fixed_abs, tag = 'smem constant byte address 0x4 - core index']
  #allocation1 [shape = 'u32[72,128]{1,0:T(1,128)}', space=vmem, size = 0x9000, scoped, tag = 'internal scratch']
  #allocation2 [shape = 'f32[32,128]{1,0:T(8,128)}', space=vmem, size = 0x4000, scoped, tag = 'scratch operand']
  %s0 = inlined_call_operand.vmem [shape: s32[1,256], index: 0, kind: input, shape index: {}]
  %s1 = inlined_call_operand.vmem [shape: s32[1,32], index: 1, kind: input, shape index: {}]
  %s2 = inlined_call_operand.vmem [shape: f32[32,5], index: 2, kind: input, shape index: {}]
  %s3 = inlined_call_operand.vmem [shape: f32[256,9], index: 3, kind: input, shape index: {}]
  %s4 = inlined_call_operand.hbm [shape: f32[544,128], index: 4, kind: input, shape index: {}]
  %s5 = inlined_call_operand.hbm [shape: f32[8,128], index: 5, kind: output, shape index: {}]
  %s6 = sld [smem:[#allocation0]]
  $region65: #{tpu_custom_call.1} parent=0
    _
  %s8 = ssub.s32 1, %s6
  %s9 = scalar_select 0, %s8, %s6
  $region1: #{tpu_custom_call.1} parent=0
    #allocation3 [shape = 'u8[278528]{0}', space=vmem, size = 0x44000, scoped, tag = 'input window, operand 4, single buffered']
    #allocation4 [shape = 's32[2]{0}', space=sflag, size = 0x8, scoped, tag = 'scoped memory for tpu_custom_call.1']
    #allocation5 [shape = 's32[2]{0}', space=sflag, size = 0x8, scoped, tag = 'scoped memory for tpu_custom_call.1']
    #allocation6 [shape = 'u8[4096]{0}', space=vmem, size = 0x1000, scoped, tag = 'output window, operand 0, single buffered']
    %10 = vsyncpa [#allocation4], 0
    %11 = vsyncpa [#allocation5], 0
    loop: start=0, step=1, limit=4
    $region2: #{tpu_custom_call.1} parent=1 // loop_pre_header
      _
    $region3: #{tpu_custom_call.1} parent=1 // loop_header
      %s13 = sphi 0, %s17
      %p14 = scmp.ge.s32.totalorder %s13, 4
      %s23 = sphi 0, %s25
      %s26 = sphi 0, %s23
      %s27 = sphi 0, %s26
      %s43 = sphi 0, %s27
      %s47 = sphi 0, %s47
      %s49 = sphi 0, %s47
      %s50 = sphi 0, %s49
      %s64 = sphi 0, %s50
      %s68 = sphi 0, %s68
      %s70 = sphi 0, %s68
      %s71 = sphi 0, %s70
      %s85 = sphi 0, %s71
      %s91 = sphi 0, %s93
      %s94 = sphi 0, %s91
      %s95 = sphi 0, %s94
      %s111 = sphi 0, %s95
      %s115 = sphi 0, %s115
      %s117 = sphi 0, %s115
      %s118 = sphi 0, %s117
      %s132 = sphi 0, %s118
      %s136 = sphi 0, %s136
      %s138 = sphi 0, %s136
      %s139 = sphi 0, %s138
      %s153 = sphi 0, %s139
    $region4: #{tpu_custom_call.1} parent=1 // loop_header_branch
      %16 = sbr.rel (%p14) target = $region8
    $region5: #{tpu_custom_call.1} parent=1 // loop_body
      %s18 = ssub.s32 %s13, 1
      %s19 = ssub.s32 %s13, 2
      %s20 = sadd.s32 %s13, 1
      %s21 = ssub.s32 %s13, %s20
      %p22 = scmp.eq.s32.totalorder %s21, 0
      %s24 = sadd.s32 %s23, 1
      %s25 = scalar_select %p22, %s23, %s24
      %p28 = pneg %p22
      %p29 = scmp.eq.s32.totalorder %s13, 1
      %p30 = por %p28, %p29
      %p31 = scmp.ne.s32.totalorder %s23, %s26
      %p32 = scmp.eq.s32.totalorder %s13, 0
      %p33 = por %p31, %p32
      %p34 = scmp.ne.s32.totalorder %s23, %s26
      %p35 = scmp.eq.s32.totalorder %s18, 1
      %p36 = por %p34, %p35
      %p37 = scmp.ne.s32.totalorder %s26, %s27
      %p38 = scmp.eq.s32.totalorder %s18, 0
      %p39 = por %p37, %p38
      %p40 = scmp.ne.s32.totalorder %s26, %s27
      %p41 = scmp.eq.s32.totalorder %s19, 1
      %p42 = por %p40, %p41
      %p44 = scmp.ne.s32.totalorder %s27, %s43
      %p45 = scmp.eq.s32.totalorder %s19, 0
      %p46 = por %p44, %p45
      %s48 = sadd.s32 %s47, 1
      %p51 = scmp.eq.s32.totalorder %s13, 1
      %p52 = scmp.ne.s32.totalorder %s47, %s49
      %p53 = scmp.eq.s32.totalorder %s13, 0
      %p54 = por %p52, %p53
      %p55 = scmp.ne.s32.totalorder %s47, %s49
      %p56 = scmp.eq.s32.totalorder %s18, 1
      %p57 = por %p55, %p56
      %p58 = scmp.ne.s32.totalorder %s49, %s50
      %p59 = scmp.eq.s32.totalorder %s18, 0
      %p60 = por %p58, %p59
      %p61 = scmp.ne.s32.totalorder %s49, %s50
      %p62 = scmp.eq.s32.totalorder %s19, 1
      %p63 = por %p61, %p62
      %p65 = scmp.ne.s32.totalorder %s50, %s64
      %p66 = scmp.eq.s32.totalorder %s19, 0
      %p67 = por %p65, %p66
      %s69 = sadd.s32 %s68, 1
      %p72 = scmp.eq.s32.totalorder %s13, 1
      %p73 = scmp.ne.s32.totalorder %s68, %s70
      %p74 = scmp.eq.s32.totalorder %s13, 0
      %p75 = por %p73, %p74
      %p76 = scmp.ne.s32.totalorder %s68, %s70
      %p77 = scmp.eq.s32.totalorder %s18, 1
      %p78 = por %p76, %p77
      %p79 = scmp.ne.s32.totalorder %s70, %s71
      %p80 = scmp.eq.s32.totalorder %s18, 0
      %p81 = por %p79, %p80
      %p82 = scmp.ne.s32.totalorder %s70, %s71
      %p83 = scmp.eq.s32.totalorder %s19, 1
      %p84 = por %p82, %p83
      %p86 = scmp.ne.s32.totalorder %s71, %s85
      %p87 = scmp.eq.s32.totalorder %s19, 0
      %p88 = por %p86, %p87
      %s89 = ssub.s32 %s13, %s20
      %p90 = scmp.eq.s32.totalorder %s89, 0
      %s92 = sadd.s32 %s91, 1
      %s93 = scalar_select %p90, %s91, %s92
      %p96 = pneg %p90
      %p97 = scmp.eq.s32.totalorder %s13, 1
      %p98 = por %p96, %p97
      %p99 = scmp.ne.s32.totalorder %s91, %s94
      %p100 = scmp.eq.s32.totalorder %s13, 0
      %p101 = por %p99, %p100
      %p102 = scmp.ne.s32.totalorder %s91, %s94
      %p103 = scmp.eq.s32.totalorder %s18, 1
      %p104 = por %p102, %p103
      %p105 = scmp.ne.s32.totalorder %s94, %s95
      %p106 = scmp.eq.s32.totalorder %s18, 0
      %p107 = por %p105, %p106
      %p108 = scmp.ne.s32.totalorder %s94, %s95
      %p109 = scmp.eq.s32.totalorder %s19, 1
      %p110 = por %p108, %p109
      %p112 = scmp.ne.s32.totalorder %s95, %s111
      %p113 = scmp.eq.s32.totalorder %s19, 0
      %p114 = por %p112, %p113
      %s116 = sadd.s32 %s115, 1
      %p119 = scmp.eq.s32.totalorder %s13, 1
      %p120 = scmp.ne.s32.totalorder %s115, %s117
      %p121 = scmp.eq.s32.totalorder %s13, 0
      %p122 = por %p120, %p121
      %p123 = scmp.ne.s32.totalorder %s115, %s117
      %p124 = scmp.eq.s32.totalorder %s18, 1
      %p125 = por %p123, %p124
      %p126 = scmp.ne.s32.totalorder %s117, %s118
      %p127 = scmp.eq.s32.totalorder %s18, 0
      %p128 = por %p126, %p127
      %p129 = scmp.ne.s32.totalorder %s117, %s118
      %p130 = scmp.eq.s32.totalorder %s19, 1
      %p131 = por %p129, %p130
      %p133 = scmp.ne.s32.totalorder %s118, %s132
      %p134 = scmp.eq.s32.totalorder %s19, 0
      %p135 = por %p133, %p134
      %s137 = sadd.s32 %s136, 1
      %p140 = scmp.eq.s32.totalorder %s13, 1
      %p141 = scmp.ne.s32.totalorder %s136, %s138
      %p142 = scmp.eq.s32.totalorder %s13, 0
      %p143 = por %p141, %p142
      %p144 = scmp.ne.s32.totalorder %s136, %s138
      %p145 = scmp.eq.s32.totalorder %s18, 1
      %p146 = por %p144, %p145
      %p147 = scmp.ne.s32.totalorder %s138, %s139
      %p148 = scmp.eq.s32.totalorder %s18, 0
      %p149 = por %p147, %p148
      %p150 = scmp.ne.s32.totalorder %s138, %s139
      %p151 = scmp.eq.s32.totalorder %s19, 1
      %p152 = por %p150, %p151
      %p154 = scmp.ne.s32.totalorder %s139, %s153
      %p155 = scmp.eq.s32.totalorder %s19, 0
      %p156 = por %p154, %p155
      %p157 = scmp.le.s32.totalorder 1, %s13
      %p158 = scmp.lt.s32.totalorder %s13, 3
      %p159 = pnand %p157, %p158
      %p160 = pneg %p159
      // Predicated region
      $region9: #{tpu_custom_call.1} parent=5 // pred_check
        _
      $region10: #{tpu_custom_call.1} parent=5 // pred_check_branch
        %162 = sbr.rel (%p159) target = $region12
      $region11: #{tpu_custom_call.1} parent=5 // pred_region
        %s163 = ssub.s32 %s13, 1
        // Predicated region
        $region13: #{tpu_custom_call.1} parent=11 // pred_check
          %p164 = pneg %p60
        $region14: #{tpu_custom_call.1} parent=11 // pred_check_branch
          %166 = sbr.rel (%p164) target = $region16
        $region15: #{tpu_custom_call.1} parent=11 // pred_region
          _
        $region16: #{tpu_custom_call.1} parent=11 // pred_fallthru
          _
        // Predicated region
        $region17: #{tpu_custom_call.1} parent=11 // pred_check
          %p167 = pneg %p81
        $region18: #{tpu_custom_call.1} parent=11 // pred_check_branch
          %169 = sbr.rel (%p167) target = $region20
        $region19: #{tpu_custom_call.1} parent=11 // pred_region
          _
        $region20: #{tpu_custom_call.1} parent=11 // pred_fallthru
          _
        // Predicated region
        $region21: #{tpu_custom_call.1} parent=11 // pred_check
          %p170 = pneg %p128
        $region22: #{tpu_custom_call.1} parent=11 // pred_check_branch
          %172 = sbr.rel (%p170) target = $region24
        $region23: #{tpu_custom_call.1} parent=11 // pred_region
          %174 = vsyncadd [#allocation4], 0
          %s175 = sshll.u32 %s4, 4
          %s176 = int_to_ptr.hbm [resolvable:$true] %s175
          %s177 = sshll.u32 [#allocation3], 4
          %s178 = int_to_ptr.vmem [resolvable:$true] %s177
          %183 = dma.hbm_to_vmem [thread:$0]  %s176, 8704, %s178, [#allocation4], 128, 128, 8
        $region24: #{tpu_custom_call.1} parent=11 // pred_fallthru
          _
      $region12: #{tpu_custom_call.1} parent=5 // pred_fallthru
        _
      %p184 = scmp.lt.s32.totalorder %s13, 2
      // Predicated region
      $region25: #{tpu_custom_call.1} parent=5 // pred_check
        %p185 = pneg %p184
      $region26: #{tpu_custom_call.1} parent=5 // pred_check_branch
        %187 = sbr.rel (%p185) target = $region28
      $region27: #{tpu_custom_call.1} parent=5 // pred_region
        // Predicated region
        $region29: #{tpu_custom_call.1} parent=27 // pred_check
          %p188 = pneg %p33
        $region30: #{tpu_custom_call.1} parent=27 // pred_check_branch
          %190 = sbr.rel (%p188) target = $region32
        $region31: #{tpu_custom_call.1} parent=27 // pred_region
          %p191 = scmp.lt.s32.totalorder %s13, 1
          %s192 = scalar_select %p191, %s13, 1
          %s193 = scalar_lea.vmem %s0, %s192
        $region32: #{tpu_custom_call.1} parent=27 // pred_fallthru
          _
        // Predicated region
        $region33: #{tpu_custom_call.1} parent=27 // pred_check
          %p194 = pneg %p101
        $region34: #{tpu_custom_call.1} parent=27 // pred_check_branch
          %196 = sbr.rel (%p194) target = $region36
        $region35: #{tpu_custom_call.1} parent=27 // pred_region
          %s197 = smul.u32 16, %s13
          %p198 = scmp.lt.s32.totalorder %s197, 31
          %s199 = scalar_select %p198, %s197, 31
          %s200 = smul.addr %s199, 8
          %s201 = scalar_lea.vmem %s3, %s200
          %s202 = smul.u32 16, %s13
        $region36: #{tpu_custom_call.1} parent=27 // pred_fallthru
          _
      $region28: #{tpu_custom_call.1} parent=5 // pred_fallthru
        _
      %p203 = scmp.le.s32.totalorder 1, %s13
      %p204 = scmp.lt.s32.totalorder %s13, 3
      %p205 = pnand %p203, %p204
      %p206 = pneg %p205
      // Predicated region
      $region37: #{tpu_custom_call.1} parent=5 // pred_check
        _
      $region38: #{tpu_custom_call.1} parent=5 // pred_check_branch
        %208 = sbr.rel (%p205) target = $region40
      $region39: #{tpu_custom_call.1} parent=5 // pred_region
        %s209 = ssub.s32 %s13, 1
        // Predicated region
        $region41: #{tpu_custom_call.1} parent=39 // pred_check
          %p210 = pneg %p128
        $region42: #{tpu_custom_call.1} parent=39 // pred_check_branch
          %212 = sbr.rel (%p210) target = $region44
        $region43: #{tpu_custom_call.1} parent=39 // pred_region
          %214 = dma.done [#allocation4], 8704
        $region44: #{tpu_custom_call.1} parent=39 // pred_fallthru
          _
        %p215 = scmp.lt.s32.totalorder %s18, 1
        %s216 = scalar_select %p215, %s18, 1
        %s217 = scalar_lea.vmem %s0, %s216
        %p218 = pneg %p39
        %p219 = pneg %p36
        %p220 = pneg %p60
        %p221 = pneg %p57
        %p222 = pneg %p81
        %p223 = pneg %p78
        %s224 = smul.u32 16, %s18
        %p225 = scmp.lt.s32.totalorder %s224, 31
        %s226 = scalar_select %p225, %s224, 31
        %s227 = smul.addr %s226, 8
        %s228 = scalar_lea.vmem %s3, %s227
        %p229 = pneg %p107
        %p230 = pneg %p104
        %p231 = pneg %p128
        %p232 = pneg %p125
        %p233 = pneg %p149
        %p234 = pneg %p146
        %p235 = scmp.lt.s32.totalorder %s18, 1
        %s236 = scalar_select %p235, %s18, 1
        %s237 = scalar_lea.vmem %s0, %s236
        %s238 = smul.u32 16, %s18
        %p239 = scmp.lt.s32.totalorder %s238, 31
        %s240 = scalar_select %p239, %s238, 31
        %s241 = smul.addr %s240, 8
        %s242 = scalar_lea.vmem %s3, %s241
        %s243 = smul.u32 16, %s18
        %p245 = scmp.eq.s32.totalorder %s18, 0
        // Predicated region
        $region45: #{tpu_custom_call.1} parent=39 // pred_check
          %p246 = pneg %p245
        $region46: #{tpu_custom_call.1} parent=39 // pred_check_branch
          %248 = sbr.rel (%p246) target = $region48
        $region47: #{tpu_custom_call.1} parent=39 // pred_region
          %249 = vst [vmem:[#allocation2] sm:$0xff] 0.0
          %250 = vst [vmem:[#allocation2 + $0x8] sm:$0xff] 0.0
          %251 = vst [vmem:[#allocation2 + $0x10] sm:$0xff] 0.0
          %252 = vst [vmem:[#allocation2 + $0x18] sm:$0xff] 0.0
        $region48: #{tpu_custom_call.1} parent=39 // pred_fallthru
          _
        %v253 = vld [vmem:[%s242] sm:$0xff]
        %v254 = vld [vmem:[%s242 + $0x8] sm:$0xff]
        %v255 = vld [vmem:[%s242 + $0x10] sm:$0xff]
        %v256 = vld [vmem:[%s242 + $0x18] sm:$0xff]
        %v257 = vld [vmem:[%s242 + $0x20] sm:$0xff]
        %v258 = vld [vmem:[%s242 + $0x28] sm:$0xff]
        %v259 = vld [vmem:[%s242 + $0x30] sm:$0xff]
        %v260 = vld [vmem:[%s242 + $0x38] sm:$0xff]
        %v261 = vld [vmem:[%s242 + $0x40] sm:$0xff]
        %v262 = vld [vmem:[%s242 + $0x48] sm:$0xff]
        %v263 = vld [vmem:[%s242 + $0x50] sm:$0xff]
        %v264 = vld [vmem:[%s242 + $0x58] sm:$0xff]
        %v265 = vld [vmem:[%s242 + $0x60] sm:$0xff]
        %v266 = vld [vmem:[%s242 + $0x68] sm:$0xff]
        %v267 = vld [vmem:[%s242 + $0x70] sm:$0xff]
        %v268 = vld [vmem:[%s242 + $0x78] sm:$0xff]
        %v269 = vld [vmem:[#allocation3] sm:$0xff]
        %v270 = vld [vmem:[#allocation3 + $0x8] sm:$0x1]
        %vm271 = vcmask 72704
        %v273 = vsel %vm271, %v253, 0
        %v276 = vsel %vm271, %v254, 0
        %v279 = vsel %vm271, %v255, 0
        %v282 = vsel %vm271, %v256, 0
        %v285 = vsel %vm271, %v257, 0
        %v288 = vsel %vm271, %v258, 0
        %v291 = vsel %vm271, %v259, 0
        %v294 = vsel %vm271, %v260, 0
        %v297 = vsel %vm271, %v261, 0
        %v300 = vsel %vm271, %v262, 0
        %v303 = vsel %vm271, %v263, 0
        %v306 = vsel %vm271, %v264, 0
        %v309 = vsel %vm271, %v265, 0
        %v312 = vsel %vm271, %v266, 0
        %v315 = vsel %vm271, %v267, 0
        %v318 = vsel %vm271, %v268, 0
        %vm320 = vcmask 1040384
        %v322 = vsel %vm320, %v270, 0
        %324 = vmatpush.msra.mxu0 0.0
        %325 = vmatpush.msra.mxu0 0.0
        %326 = vmatpush.msra.mxu0 0.0
        %327 = vmatpush.msra.mxu0 0.0
        %328 = vmatpush.msra.mxu0 0.0
        %329 = vmatpush.msra.mxu0 0.0
        %330 = vmatpush.msra.mxu0 0.0
        %331 = vmatpush.msra.mxu0 0.0
        %332 = vmatpush.msra.mxu0 0.0
        %333 = vmatpush.msra.mxu0 0.0
        %334 = vmatpush.msra.mxu0 0.0
        %335 = vmatpush.msra.mxu0 0.0
        %336 = vmatpush.msra.mxu0 0.0
        %337 = vmatpush.msra.mxu0 0.0
        %338 = vmatpush.msra.mxu0 %v322
        %339 = vmatpush.msra.mxu0 %v269
        %340 = vmatmul.f32.gmra.mxu0 %v273
        %v341 = vpop.f32.mrf.mxu0
        %v342 = vadd.f32 0.0, %v341
        %343 = vmatmul.f32.gmra.mxu0 %v276
        %v344 = vpop.f32.mrf.mxu0
        %v345 = vadd.f32 0.0, %v344
        %346 = vmatmul.f32.gmra.mxu0 %v279
        %v347 = vpop.f32.mrf.mxu0
        %v348 = vadd.f32 0.0, %v347
        %349 = vmatmul.f32.gmra.mxu0 %v282
        %v350 = vpop.f32.mrf.mxu0
        %v351 = vadd.f32 0.0, %v350
        %352 = vmatmul.f32.gmra.mxu0 %v285
        %v353 = vpop.f32.mrf.mxu0
        %v354 = vadd.f32 0.0, %v353
        %355 = vmatmul.f32.gmra.mxu0 %v288
        %v356 = vpop.f32.mrf.mxu0
        %v357 = vadd.f32 0.0, %v356
        %358 = vmatmul.f32.gmra.mxu0 %v291
        %v359 = vpop.f32.mrf.mxu0
        %v360 = vadd.f32 0.0, %v359
        %361 = vmatmul.f32.gmra.mxu0 %v294
        %v362 = vpop.f32.mrf.mxu0
        %v363 = vadd.f32 0.0, %v362
        %364 = vmatmul.f32.gmra.mxu0 %v297
        %v365 = vpop.f32.mrf.mxu0
        %v366 = vadd.f32 0.0, %v365
        %367 = vmatmul.f32.gmra.mxu0 %v300
        %v368 = vpop.f32.mrf.mxu0
        %v369 = vadd.f32 0.0, %v368
        %370 = vmatmul.f32.gmra.mxu0 %v303
        %v371 = vpop.f32.mrf.mxu0
        %v372 = vadd.f32 0.0, %v371
        %373 = vmatmul.f32.gmra.mxu0 %v306
        %v374 = vpop.f32.mrf.mxu0
        %v375 = vadd.f32 0.0, %v374
        %376 = vmatmul.f32.gmra.mxu0 %v309
        %v377 = vpop.f32.mrf.mxu0
        %v378 = vadd.f32 0.0, %v377
        %379 = vmatmul.f32.gmra.mxu0 %v312
        %v380 = vpop.f32.mrf.mxu0
        %v381 = vadd.f32 0.0, %v380
        %382 = vmatmul.f32.gmra.mxu0 %v315
        %v383 = vpop.f32.mrf.mxu0
        %v384 = vadd.f32 0.0, %v383
        %385 = vmatmul.f32.gmra.mxu0 %v318
        %v386 = vpop.f32.mrf.mxu0
        %v387 = vadd.f32 0.0, %v386
        %388 = vdwg.mxu0
        %v389 = vld [vmem:[%s237] sm:$0x1]
        %v390 = vlaneseq
        %v391 = vshrl.u32 %v390, 7
        %v392 = vadd.s32 %v391, 8
        %v393 = vadd.s32 %v391, 16
        %v394 = vadd.s32 %v391, 24
        %v395 = vperm.slane %v389, 0
        %vm396 = vcmp.eq.s32.totalorder %v395, %v391
        %vm397 = vcmp.eq.s32.totalorder %v395, %v392
        %vm398 = vcmp.eq.s32.totalorder %v395, %v393
        %vm399 = vcmp.eq.s32.totalorder %v395, %v394
        %v400 = vsel %vm396, 1, 0
        %v401 = vsel %vm397, 1, 0
        %v402 = vsel %vm398, 1, 0
        %v403 = vsel %vm399, 1, 0
        %v404 = vcvt.s32.f32 %v400
        %v405 = vcvt.s32.f32 %v401
        %v406 = vcvt.s32.f32 %v402
        %v407 = vcvt.s32.f32 %v403
        %v408 = vpack.c.bf16 %v405, %v404
        %v409 = vpack.c.bf16 %v407, %v406
        %v410 = vld [vmem:[#allocation2] sm:$0xff]
        %v411 = vld [vmem:[#allocation2 + $0x8] sm:$0xff]
        %v412 = vld [vmem:[#allocation2 + $0x10] sm:$0xff]
        %v413 = vld [vmem:[#allocation2 + $0x18] sm:$0xff]
        %v414 = vpack.c.bf16 %v345, %v342
        %v415 = vpack.c.bf16 %v351, %v348
        %v416 = vpack.c.bf16 %v357, %v354
        %v417 = vpack.c.bf16 %v363, %v360
        %v418 = vpack.c.bf16 %v369, %v366
        %v419 = vpack.c.bf16 %v375, %v372
        %v420 = vpack.c.bf16 %v381, %v378
        %v421 = vpack.c.bf16 %v387, %v384
        %422 = vmatpush.bf16.msra.mxu0 %v421
        %423 = vmatpush.bf16.msra.mxu0 %v420
        %424 = vmatpush.bf16.msra.mxu0 %v419
        %425 = vmatpush.bf16.msra.mxu0 %v418
        %426 = vmatpush.bf16.msra.mxu0 %v417
        %427 = vmatpush.bf16.msra.mxu0 %v416
        %428 = vmatpush.bf16.msra.mxu0 %v415
        %429 = vmatpush.bf16.msra.mxu0 %v414
        %430 = vmatmul.bf16.gmra.mxu0 %v408
        %v431 = vpop.f32.mrf.mxu0
        %v432 = vadd.f32 0.0, %v431
        %v433 = vpop.f32.mrf.mxu0
        %v434 = vadd.f32 0.0, %v433
        %435 = vmatmul.bf16.gmra.mxu0 %v409
        %v436 = vpop.f32.mrf.mxu0
        %v437 = vadd.f32 0.0, %v436
        %v438 = vpop.f32.mrf.mxu0
        %v439 = vadd.f32 0.0, %v438
        %440 = vdwg.mxu0
        %v441 = vadd.f32 %v410, %v432
        %v442 = vadd.f32 %v411, %v434
        %v443 = vadd.f32 %v412, %v437
        %v444 = vadd.f32 %v413, %v439
        %445 = vst [vmem:[#allocation2] sm:$0xff] %v441
        %446 = vst [vmem:[#allocation2 + $0x8] sm:$0xff] %v442
        %447 = vst [vmem:[#allocation2 + $0x10] sm:$0xff] %v443
        %448 = vst [vmem:[#allocation2 + $0x18] sm:$0xff] %v444
        %p449 = scmp.eq.s32.totalorder %s18, 1
        // Predicated region
        $region49: #{tpu_custom_call.1} parent=39 // pred_check
          %p450 = pneg %p449
        $region50: #{tpu_custom_call.1} parent=39 // pred_check_branch
          %452 = sbr.rel (%p450) target = $region52
        $region51: #{tpu_custom_call.1} parent=39 // pred_region
          %v453 = vld [vmem:[%s2] sm:$0xff]
          %v454 = vld [vmem:[%s2 + $0x8] sm:$0xff]
          %v455 = vld [vmem:[%s2 + $0x10] sm:$0xff]
          %v456 = vld [vmem:[%s2 + $0x18] sm:$0xff]
          %v457 = vld [vmem:[#allocation3 + $0x10] sm:$0x1f]
          %v458 = vld [vmem:[#allocation2] sm:$0xff]
          %v459 = vld [vmem:[#allocation2 + $0x8] sm:$0xff]
          %v460 = vld [vmem:[#allocation2 + $0x10] sm:$0xff]
          %v461 = vld [vmem:[#allocation2 + $0x18] sm:$0xff]
          %vm462 = vcmask 39936
          %v464 = vsel %vm462, %v453, 0
          %v467 = vsel %vm462, %v454, 0
          %v470 = vsel %vm462, %v455, 0
          %v473 = vsel %vm462, %v456, 0
          %vm475 = vcmask 1044480
          %v477 = vsel %vm475, %v457, 0
          %479 = vmatpush.msra.mxu0 0.0
          %480 = vmatpush.msra.mxu0 0.0
          %481 = vmatpush.msra.mxu0 0.0
          %482 = vmatpush.msra.mxu0 0.0
          %483 = vmatpush.msra.mxu0 0.0
          %484 = vmatpush.msra.mxu0 0.0
          %485 = vmatpush.msra.mxu0 0.0
          %486 = vmatpush.msra.mxu0 0.0
          %487 = vmatpush.msra.mxu0 0.0
          %488 = vmatpush.msra.mxu0 0.0
          %489 = vmatpush.msra.mxu0 0.0
          %490 = vmatpush.msra.mxu0 0.0
          %491 = vmatpush.msra.mxu0 0.0
          %492 = vmatpush.msra.mxu0 0.0
          %493 = vmatpush.msra.mxu0 0.0
          %494 = vmatpush.msra.mxu0 %v477
          %495 = vmatmul.f32.gmra.mxu0 %v464
          %v496 = vpop.f32.mrf.mxu0
          %v497 = vadd.f32 %v458, %v496
          %498 = vmatmul.f32.gmra.mxu0 %v467
          %v499 = vpop.f32.mrf.mxu0
          %v500 = vadd.f32 %v459, %v499
          %501 = vmatmul.f32.gmra.mxu0 %v470
          %v502 = vpop.f32.mrf.mxu0
          %v503 = vadd.f32 %v460, %v502
          %504 = vmatmul.f32.gmra.mxu0 %v473
          %v505 = vpop.f32.mrf.mxu0
          %v506 = vadd.f32 %v461, %v505
          %507 = vdwg.mxu0
          %v508 = vmax.f32 %v497, 0.0
          %v509 = vmax.f32 %v500, 0.0
          %v510 = vmax.f32 %v503, 0.0
          %v511 = vmax.f32 %v506, 0.0
          %v512 = vld [vmem:[#allocation3 + $0x18] sm:$0xff]
          %v513 = vld [vmem:[#allocation3 + $0x20] sm:$0xff]
          %v514 = vld [vmem:[#allocation3 + $0x28] sm:$0xff]
          %v515 = vld [vmem:[#allocation3 + $0x30] sm:$0xff]
          %v516 = vld [vmem:[#allocation3 + $0x38] sm:$0xff]
          %v517 = vld [vmem:[#allocation3 + $0x40] sm:$0xff]
          %v518 = vld [vmem:[#allocation3 + $0x48] sm:$0xff]
          %v519 = vld [vmem:[#allocation3 + $0x50] sm:$0xff]
          %v520 = vld [vmem:[#allocation3 + $0x58] sm:$0xff]
          %v521 = vld [vmem:[#allocation3 + $0x60] sm:$0xff]
          %v522 = vld [vmem:[#allocation3 + $0x68] sm:$0xff]
          %v523 = vld [vmem:[#allocation3 + $0x70] sm:$0xff]
          %v524 = vld [vmem:[#allocation3 + $0x78] sm:$0xff]
          %v525 = vld [vmem:[#allocation3 + $0x80] sm:$0xff]
          %v526 = vld [vmem:[#allocation3 + $0x88] sm:$0xff]
          %v527 = vld [vmem:[#allocation3 + $0x90] sm:$0xff]
          %528 = vmatpush.msra.mxu0 %v527
          %529 = vmatpush.msra.mxu0 %v526
          %530 = vmatpush.msra.mxu0 %v525
          %531 = vmatpush.msra.mxu0 %v524
          %532 = vmatpush.msra.mxu0 %v523
          %533 = vmatpush.msra.mxu0 %v522
          %534 = vmatpush.msra.mxu0 %v521
          %535 = vmatpush.msra.mxu0 %v520
          %536 = vmatpush.msra.mxu0 %v519
          %537 = vmatpush.msra.mxu0 %v518
          %538 = vmatpush.msra.mxu0 %v517
          %539 = vmatpush.msra.mxu0 %v516
          %540 = vmatpush.msra.mxu0 %v515
          %541 = vmatpush.msra.mxu0 %v514
          %542 = vmatpush.msra.mxu0 %v513
          %543 = vmatpush.msra.mxu0 %v512
          %544 = vmatmul.f32.gmra.mxu0 %v508
          %v545 = vpop.f32.mrf.mxu0
          %v546 = vadd.f32 0.0, %v545
          %547 = vmatmul.f32.gmra.mxu0 %v509
          %v548 = vpop.f32.mrf.mxu0
          %v549 = vadd.f32 0.0, %v548
          %550 = vmatmul.f32.gmra.mxu0 %v510
          %v551 = vpop.f32.mrf.mxu0
          %v552 = vadd.f32 0.0, %v551
          %553 = vmatmul.f32.gmra.mxu0 %v511
          %v554 = vpop.f32.mrf.mxu0
          %v555 = vadd.f32 0.0, %v554
          %556 = vdwg.mxu0
          %v557 = vmax.f32 %v546, 0.0
          %v558 = vmax.f32 %v549, 0.0
          %v559 = vmax.f32 %v552, 0.0
          %v560 = vmax.f32 %v555, 0.0
          %v561 = vld [vmem:[#allocation3 + $0x98] sm:$0xff]
          %v562 = vld [vmem:[#allocation3 + $0xa0] sm:$0xff]
          %v563 = vld [vmem:[#allocation3 + $0xa8] sm:$0xff]
          %v564 = vld [vmem:[#allocation3 + $0xb0] sm:$0xff]
          %v565 = vld [vmem:[#allocation3 + $0xb8] sm:$0xff]
          %v566 = vld [vmem:[#allocation3 + $0xc0] sm:$0xff]
          %v567 = vld [vmem:[#allocation3 + $0xc8] sm:$0xff]
          %v568 = vld [vmem:[#allocation3 + $0xd0] sm:$0xff]
          %v569 = vld [vmem:[#allocation3 + $0xd8] sm:$0xff]
          %v570 = vld [vmem:[#allocation3 + $0xe0] sm:$0xff]
          %v571 = vld [vmem:[#allocation3 + $0xe8] sm:$0xff]
          %v572 = vld [vmem:[#allocation3 + $0xf0] sm:$0xff]
          %v573 = vld [vmem:[#allocation3 + $0xf8] sm:$0xff]
          %v574 = vld [vmem:[#allocation3 + $0x100] sm:$0xff]
          %v575 = vld [vmem:[#allocation3 + $0x108] sm:$0xff]
          %v576 = vld [vmem:[#allocation3 + $0x110] sm:$0xff]
          %577 = vmatpush.msra.mxu0 %v576
          %578 = vmatpush.msra.mxu0 %v575
          %579 = vmatpush.msra.mxu0 %v574
          %580 = vmatpush.msra.mxu0 %v573
          %581 = vmatpush.msra.mxu0 %v572
          %582 = vmatpush.msra.mxu0 %v571
          %583 = vmatpush.msra.mxu0 %v570
          %584 = vmatpush.msra.mxu0 %v569
          %585 = vmatpush.msra.mxu0 %v568
          %586 = vmatpush.msra.mxu0 %v567
          %587 = vmatpush.msra.mxu0 %v566
          %588 = vmatpush.msra.mxu0 %v565
          %589 = vmatpush.msra.mxu0 %v564
          %590 = vmatpush.msra.mxu0 %v563
          %591 = vmatpush.msra.mxu0 %v562
          %592 = vmatpush.msra.mxu0 %v561
          %593 = vmatmul.f32.gmra.mxu0 %v557
          %v594 = vpop.f32.mrf.mxu0
          %v595 = vadd.f32 0.0, %v594
          %596 = vmatmul.f32.gmra.mxu0 %v558
          %v597 = vpop.f32.mrf.mxu0
          %v598 = vadd.f32 0.0, %v597
          %599 = vmatmul.f32.gmra.mxu0 %v559
          %v600 = vpop.f32.mrf.mxu0
          %v601 = vadd.f32 0.0, %v600
          %602 = vmatmul.f32.gmra.mxu0 %v560
          %v603 = vpop.f32.mrf.mxu0
          %v604 = vadd.f32 0.0, %v603
          %605 = vdwg.mxu0
          %v606 = vmax.f32 %v595, 0.0
          %v607 = vmax.f32 %v598, 0.0
          %v608 = vmax.f32 %v601, 0.0
          %v609 = vmax.f32 %v604, 0.0
          %v610 = vld [vmem:[%s1] sm:$0x1]
          %v611 = vperm.slane %v610, 0
          %vm612 = vcmp.eq.s32.totalorder %v611, %v391
          %v613 = vsel %vm612, 1, 0
          %v614 = vcvt.s32.f32 %v613
          %v615 = vpack.c.bf16 %v614, %v614
          %v616 = vpack.c.bf16 %v607, %v606
          %v617 = vpack.c.bf16 %v609, %v608
          %vm618 = vcmask 261120
          %v620 = vsel %vm618, %v615, 0
          %622 = vmatpush.bf16.msra.mxu0 0
          %623 = vmatpush.bf16.msra.mxu0 0
          %624 = vmatpush.bf16.msra.mxu0 0
          %625 = vmatpush.bf16.msra.mxu0 0
          %626 = vmatpush.bf16.msra.mxu0 0
          %627 = vmatpush.bf16.msra.mxu0 0
          %628 = vmatpush.bf16.msra.mxu0 %v617
          %629 = vmatpush.bf16.msra.mxu0 %v616
          %630 = vmatmul.bf16.gmra.mxu0 %v620
          %v631 = vpop.f32.mrf.mxu0
          %v632 = vadd.f32 0.0, %v631
          %v633 = vpop.f32.mrf.mxu0
          %634 = vdwg.mxu0
          %v635 = vld [vmem:[#allocation3 + $0x118] sm:$0xff]
          %v636 = vld [vmem:[#allocation3 + $0x120] sm:$0xff]
          %v637 = vld [vmem:[#allocation3 + $0x128] sm:$0xff]
          %v638 = vld [vmem:[#allocation3 + $0x130] sm:$0xff]
          %v639 = vld [vmem:[#allocation3 + $0x138] sm:$0xff]
          %v640 = vld [vmem:[#allocation3 + $0x140] sm:$0xff]
          %v641 = vld [vmem:[#allocation3 + $0x148] sm:$0xff]
          %v642 = vld [vmem:[#allocation3 + $0x150] sm:$0xff]
          %v643 = vld [vmem:[#allocation3 + $0x158] sm:$0xff]
          %v644 = vld [vmem:[#allocation3 + $0x160] sm:$0xff]
          %v645 = vld [vmem:[#allocation3 + $0x168] sm:$0xff]
          %v646 = vld [vmem:[#allocation3 + $0x170] sm:$0xff]
          %v647 = vld [vmem:[#allocation3 + $0x178] sm:$0xff]
          %v648 = vld [vmem:[#allocation3 + $0x180] sm:$0xff]
          %v649 = vld [vmem:[#allocation3 + $0x188] sm:$0xff]
          %v650 = vld [vmem:[#allocation3 + $0x190] sm:$0xff]
          %v651 = vld [vmem:[#allocation3 + $0x218] sm:$0x1]
          %v652 = vperm.slane %v651, 0
          %653 = vmatpush.msra.mxu0 %v650
          %654 = vmatpush.msra.mxu0 %v649
          %655 = vmatpush.msra.mxu0 %v648
          %656 = vmatpush.msra.mxu0 %v647
          %657 = vmatpush.msra.mxu0 %v646
          %658 = vmatpush.msra.mxu0 %v645
          %659 = vmatpush.msra.mxu0 %v644
          %660 = vmatpush.msra.mxu0 %v643
          %661 = vmatpush.msra.mxu0 %v642
          %662 = vmatpush.msra.mxu0 %v641
          %663 = vmatpush.msra.mxu0 %v640
          %664 = vmatpush.msra.mxu0 %v639
          %665 = vmatpush.msra.mxu0 %v638
          %666 = vmatpush.msra.mxu0 %v637
          %667 = vmatpush.msra.mxu0 %v636
          %668 = vmatpush.msra.mxu0 %v635
          %669 = vmatmul.f32.gmra.mxu0 %v632
          %v670 = vpop.f32.mrf.mxu0
          %v671 = vadd.f32 %v652, %v670
          %672 = vdwg.mxu0
          %v673 = vmax.f32 %v671, 0.0
          %v674 = vld [vmem:[#allocation3 + $0x198] sm:$0xff]
          %v675 = vld [vmem:[#allocation3 + $0x1a0] sm:$0xff]
          %v676 = vld [vmem:[#allocation3 + $0x1a8] sm:$0xff]
          %v677 = vld [vmem:[#allocation3 + $0x1b0] sm:$0xff]
          %v678 = vld [vmem:[#allocation3 + $0x1b8] sm:$0xff]
          %v679 = vld [vmem:[#allocation3 + $0x1c0] sm:$0xff]
          %v680 = vld [vmem:[#allocation3 + $0x1c8] sm:$0xff]
          %v681 = vld [vmem:[#allocation3 + $0x1d0] sm:$0xff]
          %v682 = vld [vmem:[#allocation3 + $0x1d8] sm:$0xff]
          %v683 = vld [vmem:[#allocation3 + $0x1e0] sm:$0xff]
          %v684 = vld [vmem:[#allocation3 + $0x1e8] sm:$0xff]
          %v685 = vld [vmem:[#allocation3 + $0x1f0] sm:$0xff]
          %v686 = vld [vmem:[#allocation3 + $0x1f8] sm:$0xff]
          %v687 = vld [vmem:[#allocation3 + $0x200] sm:$0xff]
          %v688 = vld [vmem:[#allocation3 + $0x208] sm:$0xff]
          %v689 = vld [vmem:[#allocation3 + $0x210] sm:$0xff]
          %v690 = vld [vmem:[#allocation3 + $0x219] sm:$0x1]
          %v691 = vperm.slane %v690, 0
          %692 = vmatpush.msra.mxu0 %v689
          %693 = vmatpush.msra.mxu0 %v688
          %694 = vmatpush.msra.mxu0 %v687
          %695 = vmatpush.msra.mxu0 %v686
          %696 = vmatpush.msra.mxu0 %v685
          %697 = vmatpush.msra.mxu0 %v684
          %698 = vmatpush.msra.mxu0 %v683
          %699 = vmatpush.msra.mxu0 %v682
          %700 = vmatpush.msra.mxu0 %v681
          %701 = vmatpush.msra.mxu0 %v680
          %702 = vmatpush.msra.mxu0 %v679
          %703 = vmatpush.msra.mxu0 %v678
          %704 = vmatpush.msra.mxu0 %v677
          %705 = vmatpush.msra.mxu0 %v676
          %706 = vmatpush.msra.mxu0 %v675
          %707 = vmatpush.msra.mxu0 %v674
          %708 = vmatmul.f32.gmra.mxu0 %v673
          %v709 = vpop.f32.mrf.mxu0
          %v710 = vadd.f32 %v691, %v709
          %711 = vdwg.mxu0
          %712 = vst [vmem:[#allocation6] sm:$0xff] %v710
        $region52: #{tpu_custom_call.1} parent=39 // pred_fallthru
          _
        // Predicated region
        $region53: #{tpu_custom_call.1} parent=39 // pred_check
          %p713 = pneg %p146
        $region54: #{tpu_custom_call.1} parent=39 // pred_check_branch
          %715 = sbr.rel (%p713) target = $region56
        $region55: #{tpu_custom_call.1} parent=39 // pred_region
          %717 = vsyncadd [#allocation5], 0
          %s719 = sshll.u32 [#allocation6], 4
          %s720 = int_to_ptr.vmem [resolvable:$true] %s719
          %s721 = sshll.u32 %s5, 4
          %s722 = int_to_ptr.hbm [resolvable:$true] %s721
          %724 = dma.vmem_to_hbm [thread:$0]  %s720, 128, %s722, [#allocation5]
        $region56: #{tpu_custom_call.1} parent=39 // pred_fallthru
          _
        // Predicated region
        $region57: #{tpu_custom_call.1} parent=39 // pred_check
          %p725 = pneg %p146
        $region58: #{tpu_custom_call.1} parent=39 // pred_check_branch
          %727 = sbr.rel (%p725) target = $region60
        $region59: #{tpu_custom_call.1} parent=39 // pred_region
          %729 = dma.done [#allocation5], 128
        $region60: #{tpu_custom_call.1} parent=39 // pred_fallthru
          _
      $region40: #{tpu_custom_call.1} parent=5 // pred_fallthru
        _
      %p730 = scmp.le.s32.totalorder 2, %s13
      // Predicated region
      $region61: #{tpu_custom_call.1} parent=5 // pred_check
        %p731 = pneg %p730
      $region62: #{tpu_custom_call.1} parent=5 // pred_check_branch
        %733 = sbr.rel (%p731) target = $region64
      $region63: #{tpu_custom_call.1} parent=5 // pred_region
        %s734 = ssub.s32 %s13, 2
      $region64: #{tpu_custom_call.1} parent=5 // pred_fallthru
        _
    $region6: #{tpu_custom_call.1} parent=1 // loop_footer
      %s17 = sadd.s32 1, %s13
    $region7: #{tpu_custom_call.1} parent=1 // loop_footer_branch
      %12 = sbr.rel target = $region3
    $region8: #{tpu_custom_call.1} parent=1 // loop_exit
      _
    %735 = vsyncpa [#allocation4], 1
    %s736 = scalar_lea.sflag [#allocation4], 1
    %737 = vsyncpa %s736, 1
    %738 = vsyncpa [#allocation5], 1
    %s739 = scalar_lea.sflag [#allocation5], 1
    %740 = vsyncpa %s739, 1

</llo_original>
